<compile_context>
chip_gen: v6e
topology: v6e:2x2x1
jax: 0.10.0
libtpu: 0.0.40
codegen_flags: <defaults>
</compile_context>

<pallas_src>
import jax
import jax.numpy as jnp
import numpy as np
from jax.experimental import pallas as pl
from jax.experimental.pallas import tpu as pltpu


def _round_up(x, m):
    return ((x + m - 1) // m) * m


# ----------------------------- JAX "glue" (sampling / grouping) -----------------------------

def farthest_point_sample(xyz, npoint):
    # TODO(synk): torch version seeds FPS with torch.randint; we start at index 0 for determinism.
    B, N, _ = xyz.shape

    def body(i, state):
        centroids, distance, farthest = state
        centroids = centroids.at[:, i].set(farthest)
        idx = jnp.broadcast_to(farthest[:, None, None], (B, 1, 3))
        centroid = jnp.take_along_axis(xyz, idx, axis=1)                 # [B, 1, 3]
        dist = jnp.sum((xyz - centroid) ** 2, axis=-1)                   # [B, N]
        distance = jnp.minimum(distance, dist)
        farthest = jnp.argmax(distance, axis=-1).astype(jnp.int32)
        return centroids, distance, farthest

    init = (jnp.zeros((B, npoint), jnp.int32),
            jnp.full((B, N), 1e10, jnp.float32),
            jnp.zeros((B,), jnp.int32))
    centroids, _, _ = jax.lax.fori_loop(0, npoint, body, init)
    return centroids


def index_points(points, idx):
    # points [B, N, C], idx [B, ...] -> [B, ..., C]
    B = points.shape[0]
    C = points.shape[-1]
    flat = idx.reshape(B, -1)
    gather_idx = jnp.broadcast_to(flat[..., None], (B, flat.shape[1], C))
    out = jnp.take_along_axis(points, gather_idx, axis=1)
    return out.reshape(*idx.shape, C)


def query_ball_point(radius, nsample, xyz, new_xyz):
    B, N, _ = xyz.shape
    S = new_xyz.shape[1]
    sqrdists = jnp.sum((new_xyz[:, :, None, :] - xyz[:, None, :, :]) ** 2, axis=-1)  # [B,S,N]
    group_idx = jnp.broadcast_to(jnp.arange(N, dtype=jnp.int32), (B, S, N))
    group_idx = jnp.where(sqrdists > radius ** 2, N, group_idx)
    group_idx = jnp.sort(group_idx, axis=-1)[:, :, :nsample]
    group_first = group_idx[:, :, 0:1]
    group_idx = jnp.where(group_idx == N, group_first, group_idx)
    return group_idx


# --------------- Pallas kernel: fused MLP (1x1 conv, BN folded) + ReLU + max over K ---------------

def _make_mlp_max_kernel(num_layers, ts, K, cout_pad):
    def kernel(x_ref, *refs):
        out_ref = refs[-1]
        prefs = refs[:-1]
        h = x_ref[...]                                   # (ts*K, Cin) bf16, centroid-major rows
        for j in range(num_layers):
            w = prefs[2 * j][...]                        # (Cin_j, Cout_j) bf16, BN scale folded in
            sh = prefs[2 * j + 1][...]                   # (1, Cout_j) f32, BN shift (+conv bias)
            acc = jnp.dot(h, w, preferred_element_type=jnp.float32)
            acc = jnp.maximum(acc + sh, 0.0)             # shift + ReLU in f32
            h = acc if j == num_layers - 1 else acc.astype(jnp.bfloat16)
        # K % 8 == 0 and cout_pad % 128 == 0, so this split of the sublane dim is layout-free.
        out_ref[...] = jnp.max(h.reshape(ts, K, cout_pad), axis=1)
    return kernel


def _choose_ts(M, K, cin, couts, cout_pad, budget_bytes):
    """Pick the row tile from a VMEM budget (v7x has only 64 MiB; keep estimate well under it)."""
    cmax = max([cin] + list(couts))
    per_ts = ((K * cin * 2) * 2            # bf16 input block, double-buffered
              + K * cmax * (4 + 4 + 2)     # live f32 acc + previous/next activations
              + cout_pad * 4 * 2)          # f32 output block, double-buffered
    ts = int(budget_bytes // max(per_ts, 1))
    ts = max(8, min(512, ts))
    ts = (ts // 8) * 8
    if M > 8:
        # keep at least 2 grid steps so a 2-TensorCore chip (v7x) can split the M axis
        ts = min(ts, _round_up((M + 1) // 2, 8))
    return max(ts, 8)


def mlp_max_pallas(grouped, ws, shifts, *, vmem_budget_bytes=20 * 1024 * 1024):
    """grouped: [M, K, Cin] (K % 8 == 0), bf16 or f32.
    ws[j]: (Cin_j, Cout_j) with BN scale already folded in; shifts[j]: (Cout_j,).
    Returns [M, Cout_last] float32."""
    M, K, cin = grouped.shape
    assert K % 8 == 0, "pad K to a multiple of 8 in the caller (duplicate neighbors)"
    num_layers = len(ws)
    c_last = ws[-1].shape[1]
    cout_pad = _round_up(c_last, 128)

    # Pad the last layer so HBM stores are lane-dense (multiple of 128 lanes); zero weight
    # columns + zero shift -> padded channels are exactly 0 and get sliced off below.
    ws = list(ws)
    shifts = list(shifts)
    if cout_pad != c_last:
        ws[-1] = jnp.pad(ws[-1], ((0, 0), (0, cout_pad - c_last)))
        shifts[-1] = jnp.pad(shifts[-1], (0, cout_pad - c_last))

    couts = [w.shape[1] for w in ws]
    ts = _choose_ts(M, K, cin, couts, cout_pad, vmem_budget_bytes)
    M_pad = _round_up(M, ts)

    # Flatten to 2D in the wrapper (free XLA reshape of contiguous HBM data); the kernel never
    # reshapes the non-128-aligned Cin axis.
    x2d = grouped.reshape(M * K, cin).astype(jnp.bfloat16)
    if M_pad != M:
        x2d = jnp.pad(x2d, ((0, (M_pad - M) * K), (0, 0)))

    in_specs = [pl.BlockSpec((ts * K, cin), lambda m: (m, 0))]
    args = [x2d]
    for w, sh in zip(ws, shifts):
        ci, co = w.shape
        in_specs.append(pl.BlockSpec((ci, co), lambda m: (0, 0)))
        in_specs.append(pl.BlockSpec((1, co), lambda m: (0, 0)))
        args += [w.astype(jnp.bfloat16), sh.reshape(1, co).astype(jnp.float32)]

    out = pl.pallas_call(
        _make_mlp_max_kernel(num_layers, ts, K, cout_pad),
        out_shape=jax.ShapeDtypeStruct((M_pad, cout_pad), jnp.float32),
        grid=(M_pad // ts,),
        in_specs=in_specs,
        out_specs=pl.BlockSpec((ts, cout_pad), lambda m: (m, 0)),
        compiler_params=pltpu.CompilerParams(
            dimension_semantics=("parallel",),
            vmem_limit_bytes=48 * 1024 * 1024),
    )(*args)
    return out[:M, :c_last]


# ----------------------------- Module -----------------------------

class PointNetSetAbstractionMsgPallas:
    def __init__(self, npoint, radius_list, nsample_list, in_channel, mlp_list, key, knn=False):
        self.npoint = npoint
        self.radius_list = radius_list
        self.nsample_list = nsample_list
        self.knn = knn
        eps = 1e-5
        self.params = []  # per scale: list of (w_folded [cin, cout], shift [cout])
        for mlp in mlp_list:
            last = in_channel + 3
            layers = []
            for out_c in mlp:
                key, k1, k2 = jax.random.split(key, 3)
                bound = 1.0 / np.sqrt(last)
                # Conv2d(last, out_c, 1) weight [out_c, last, 1, 1] stored transposed as [last, out_c]
                w = jax.random.uniform(k1, (last, out_c), jnp.float32, -bound, bound)
                b = jax.random.uniform(k2, (out_c,), jnp.float32, -bound, bound)
                # TODO(synk): BatchNorm2d folded in eval mode with default running stats
                # (mean=0, var=1, gamma=1, beta=0); train-mode batch statistics not reproduced.
                gamma = jnp.ones((out_c,), jnp.float32)
                beta = jnp.zeros((out_c,), jnp.float32)
                mean = jnp.zeros((out_c,), jnp.float32)
                var = jnp.ones((out_c,), jnp.float32)
                scale = gamma / jnp.sqrt(var + eps)
                shift = beta + (b - mean) * scale
                w_folded = w * scale[None, :]          # fold BN scale into the conv weight
                layers.append((w_folded, shift))
                last = out_c
            self.params.append(layers)

    def __call__(self, xyz, points, seed_idx=None):
        B, N, _ = xyz.shape
        S = self.npoint
        idx = farthest_point_sample(xyz, S) if seed_idx is None else seed_idx
        new_xyz = index_points(xyz, idx)                                   # [B, S, 3]

        outs = []
        for i, radius in enumerate(self.radius_list):
            K = self.nsample_list[i]
            if self.knn:
                d = jnp.sum((new_xyz[:, :, None, :] - xyz[:, None, :, :]) ** 2, -1)
                gidx = jnp.argsort(d, axis=-1)[:, :, :K].astype(jnp.int32)
            else:
                gidx = query_ball_point(radius, K, xyz, new_xyz)           # [B, S, K]
            # Pad K to a multiple of 8 (sublane tiling) by repeating the first neighbor index;
            # duplicate neighbors do not change the max-pool result.
            K_pad = _round_up(K, 8)
            if K_pad != K:
                gidx = jnp.concatenate(
                    [gidx, jnp.broadcast_to(gidx[:, :, :1], (B, S, K_pad - K))], axis=-1)
            gxyz = index_points(xyz, gidx) - new_xyz[:, :, None, :]        # [B, S, Kp, 3]
            if points is not None:
                gpts = index_points(points, gidx)                          # [B, S, Kp, D]
                grouped = jnp.concatenate([gpts, gxyz], axis=-1)           # [B, S, Kp, D+3]
            else:
                grouped = gxyz
            # TODO(synk): the neighborhood gather still runs in XLA (take_along_axis), so the
            # grouped tensor round-trips HBM once; an in-kernel gather via scalar-prefetched
            # indices + make_async_copy would remove that extra pass.
            grouped = grouped.astype(jnp.bfloat16)                         # halve HBM traffic
            cin = grouped.shape[-1]
            grouped_flat = grouped.reshape(B * S, K_pad, cin)

            ws = [p[0] for p in self.params[i]]
            shs = [p[1] for p in self.params[i]]
            out = mlp_max_pallas(grouped_flat, ws, shs)                    # [B*S, Cout]
            outs.append(out.reshape(B, S, -1))

        new_points_concat = jnp.concatenate(outs, axis=-1)                 # [B, S, sum(D')]
        return new_xyz, new_points_concat


# pure-JAX reference of the fused hot path (same bf16 casts), for validation
def _ref_mlp_max(grouped_bf16, ws, shs):
    h = grouped_bf16
    n = len(ws)
    for j, (w, sh) in enumerate(zip(ws, shs)):
        a = jnp.einsum("mkc,cd->mkd", h, w.astype(jnp.bfloat16),
                       preferred_element_type=jnp.float32)
        a = jnp.maximum(a + sh[None, None, :], 0.0)
        h = a if j == n - 1 else a.astype(jnp.bfloat16)
    return jnp.max(h, axis=1)


if __name__ == "__main__":
    key = jax.random.PRNGKey(0)
    k_xyz, k_pts, k_param = jax.random.split(key, 3)

    B, N, D = 2, 64, 4
    npoint = 16
    radius_list = [0.2, 0.4]
    nsample_list = [8, 16]
    mlp_list = [[16, 32], [16, 32]]

    xyz = jax.random.uniform(k_xyz, (B, N, 3), jnp.float32)
    points = jax.random.normal(k_pts, (B, N, D), jnp.float32)

    module = PointNetSetAbstractionMsgPallas(
        npoint, radius_list, nsample_list, in_channel=D, mlp_list=mlp_list, key=k_param)

    new_xyz, new_points = module(xyz, points)
    new_xyz = jax.block_until_ready(new_xyz)
    new_points = jax.block_until_ready(new_points)

    assert new_xyz.shape == (B, npoint, 3)
    assert new_points.shape == (B, npoint, sum(m[-1] for m in mlp_list))

    # validate the Pallas hot path against a pure-JAX reference on scale 0
    idx = farthest_point_sample(xyz, npoint)
    nx = index_points(xyz, idx)
    gidx = query_ball_point(radius_list[0], nsample_list[0], xyz, nx)
    gxyz = index_points(xyz, gidx) - nx[:, :, None, :]
    grouped = jnp.concatenate([index_points(points, gidx), gxyz], axis=-1).astype(jnp.bfloat16)
    gf = grouped.reshape(B * npoint, nsample_list[0], -1)
    ws = [p[0] for p in module.params[0]]
    shs = [p[1] for p in module.params[0]]
    got = mlp_max_pallas(gf, ws, shs)
    want = _ref_mlp_max(gf, ws, shs)
    np.testing.assert_allclose(np.asarray(got), np.asarray(want), atol=2e-2, rtol=2e-2)

    print("KERNEL_OK")
</pallas_src>

<mosaic_0001>
module attributes {stable_mosaic.version = 11 : i64} {
  func.func @kernel(%arg0: i32, %arg1: memref<128x7xbf16, #tpu.memory_space<vmem>>, %arg2: memref<7x16xbf16, #tpu.memory_space<vmem>>, %arg3: memref<1x16xf32, #tpu.memory_space<vmem>>, %arg4: memref<16x128xbf16, #tpu.memory_space<vmem>>, %arg5: memref<1x128xf32, #tpu.memory_space<vmem>>, %arg6: memref<16x128xf32, #tpu.memory_space<vmem>>) attributes {dimension_semantics = [#tpu.dimension_semantics<parallel>], iteration_bounds = array<i64: 2>, scalar_prefetch = 0 : i64, scratch_operands = 0 : i64, tpu.core_type = #tpu.core_type<tc>, window_params = [{transform_indices = @transform_0, window_bounds = array<i64: 128, 7>}, {pipeline_mode = #tpu.pipeline_mode<synchronous>, transform_indices = @transform_1, window_bounds = array<i64: 7, 16>}, {pipeline_mode = #tpu.pipeline_mode<synchronous>, transform_indices = @transform_2, window_bounds = array<i64: 1, 16>}, {pipeline_mode = #tpu.pipeline_mode<synchronous>, transform_indices = @transform_3, window_bounds = array<i64: 16, 128>}, {pipeline_mode = #tpu.pipeline_mode<synchronous>, transform_indices = @transform_4, window_bounds = array<i64: 1, 128>}, {transform_indices = @transform_5, window_bounds = array<i64: 16, 128>}]} {
    %c0 = arith.constant 0 : index
    %c0_0 = arith.constant 0 : index
    %0 = vector.load %arg1[%c0, %c0_0] : memref<128x7xbf16, #tpu.memory_space<vmem>>, vector<128x7xbf16>
    %c0_1 = arith.constant 0 : index
    %c0_2 = arith.constant 0 : index
    %1 = vector.load %arg2[%c0_1, %c0_2] : memref<7x16xbf16, #tpu.memory_space<vmem>>, vector<7x16xbf16>
    %c0_3 = arith.constant 0 : index
    %c0_4 = arith.constant 0 : index
    %2 = vector.load %arg3[%c0_3, %c0_4] : memref<1x16xf32, #tpu.memory_space<vmem>>, vector<1x16xf32>
    %cst = arith.constant dense<0.000000e+00> : vector<128x16xf32>
    %3 = tpu.matmul %0, %1, %cst {dimension_numbers = #tpu.dot_dimension_numbers<[1], [0], [0], [1], [0, 0, 1, 1], [], []>} : vector<128x7xbf16>, vector<7x16xbf16>, vector<128x16xf32> -> vector<128x16xf32>
    %4 = vector.broadcast %2 : vector<1x16xf32> to vector<128x16xf32>
    %5 = arith.addf %3, %4 : vector<128x16xf32>
    %cst_5 = arith.constant 0.000000e+00 : f32
    %6 = vector.broadcast %cst_5 : f32 to vector<128x16xf32>
    %7 = arith.maximumf %5, %6 : vector<128x16xf32>
    %8 = arith.truncf %7 : vector<128x16xf32> to vector<128x16xbf16>
    %c0_6 = arith.constant 0 : index
    %c0_7 = arith.constant 0 : index
    %9 = vector.load %arg4[%c0_6, %c0_7] : memref<16x128xbf16, #tpu.memory_space<vmem>>, vector<16x128xbf16>
    %c0_8 = arith.constant 0 : index
    %c0_9 = arith.constant 0 : index
    %10 = vector.load %arg5[%c0_8, %c0_9] : memref<1x128xf32, #tpu.memory_space<vmem>>, vector<1x128xf32>
    %cst_10 = arith.constant dense<0.000000e+00> : vector<128x128xf32>
    %11 = tpu.matmul %8, %9, %cst_10 {dimension_numbers = #tpu.dot_dimension_numbers<[1], [0], [0], [1], [0, 0, 1, 1], [], []>} : vector<128x16xbf16>, vector<16x128xbf16>, vector<128x128xf32> -> vector<128x128xf32>
    %12 = vector.broadcast %10 : vector<1x128xf32> to vector<128x128xf32>
    %13 = arith.addf %11, %12 : vector<128x128xf32>
    %cst_11 = arith.constant 0.000000e+00 : f32
    %14 = vector.broadcast %cst_11 : f32 to vector<128x128xf32>
    %15 = arith.maximumf %13, %14 : vector<128x128xf32>
    %16 = vector.shape_cast %15 : vector<128x128xf32> to vector<16x8x128xf32>
    %cst_12 = arith.constant dense<0xFF800000> : vector<16x128xf32>
    %17 = vector.multi_reduction <maximumf>, %16, %cst_12 [1] : vector<16x8x128xf32> to vector<16x128xf32>
    %c0_13 = arith.constant 0 : index
    %c0_14 = arith.constant 0 : index
    %18 = vector.load %arg6[%c0_13, %c0_14] : memref<16x128xf32, #tpu.memory_space<vmem>>, vector<16x128xf32>
    tpu.vector_store %arg6[%c0_13, %c0_14], %17 {strides = array<i32>} : memref<16x128xf32, #tpu.memory_space<vmem>>, vector<16x128xf32>,
    return
  }
  func.func @transform_0(%arg0: i32) -> (i32, i32) {
    %c0_i32 = arith.constant 0 : i32
    %c0_i32_0 = arith.constant 0 : i32
    return %arg0, %c0_i32 : i32, i32
  }
  func.func @transform_1(%arg0: i32) -> (i32, i32) {
    %c0_i32 = arith.constant 0 : i32
    %c0_i32_0 = arith.constant 0 : i32
    %c0_i32_1 = arith.constant 0 : i32
    return %c0_i32, %c0_i32_0 : i32, i32
  }
  func.func @transform_2(%arg0: i32) -> (i32, i32) {
    %c0_i32 = arith.constant 0 : i32
    %c0_i32_0 = arith.constant 0 : i32
    %c0_i32_1 = arith.constant 0 : i32
    return %c0_i32, %c0_i32_0 : i32, i32
  }
  func.func @transform_3(%arg0: i32) -> (i32, i32) {
    %c0_i32 = arith.constant 0 : i32
    %c0_i32_0 = arith.constant 0 : i32
    %c0_i32_1 = arith.constant 0 : i32
    return %c0_i32, %c0_i32_0 : i32, i32
  }
  func.func @transform_4(%arg0: i32) -> (i32, i32) {
    %c0_i32 = arith.constant 0 : i32
    %c0_i32_0 = arith.constant 0 : i32
    %c0_i32_1 = arith.constant 0 : i32
    return %c0_i32, %c0_i32_0 : i32, i32
  }
  func.func @transform_5(%arg0: i32) -> (i32, i32) {
    %c0_i32 = arith.constant 0 : i32
    %c0_i32_0 = arith.constant 0 : i32
    return %arg0, %c0_i32 : i32, i32
  }
}

</mosaic_0001>

<llo_original>
// kernel: tpu_custom_call.1
$region0: #{tpu_custom_call.1}
  #allocation0 [shape = 'u32[]', space=smem, size = 0x4, offset = 0x4, fixed_abs, tag = 'smem constant byte address 0x4 - core index']
  #allocation1 [shape = 'u32[144,128]{1,0:T(1,128)}', space=vmem, size = 0x12000, scoped, tag = 'internal scratch']
  %s0 = inlined_call_operand.vmem [shape: bf16[256,7], index: 0, kind: input, shape index: {}]
  %s1 = inlined_call_operand.vmem [shape: bf16[7,16], index: 1, kind: input, shape index: {}]
  %s2 = inlined_call_operand.vmem [shape: f32[1,16], index: 2, kind: input, shape index: {}]
  %s3 = inlined_call_operand.vmem [shape: bf16[16,128], index: 3, kind: input, shape index: {}]
  %s4 = inlined_call_operand.vmem [shape: f32[1,128], index: 4, kind: input, shape index: {}]
  %s5 = inlined_call_operand.hbm [shape: f32[32,128], index: 5, kind: output, shape index: {}]
  %s6 = sld [smem:[#allocation0]]
  $region53: #{tpu_custom_call.1} parent=0
    _
  %s8 = ssub.s32 1, %s6
  %s9 = scalar_select 0, %s8, %s6
  $region1: #{tpu_custom_call.1} parent=0
    #allocation2 [shape = 'u8[16384]{0}', space=vmem, size = 0x4000, scoped, tag = 'output window, operand 0']
    #allocation3 [shape = 's32[2]{0}', space=sflag, size = 0x8, scoped, tag = 'scoped memory for tpu_custom_call.1']
    %10 = vsyncpa [#allocation3], 0
    %s11 = scalar_lea.sflag [#allocation3], 1
    %12 = vsyncpa %s11, 0
    loop: start=0, step=1, limit=4
    $region2: #{tpu_custom_call.1} parent=1 // loop_pre_header
      _
    $region3: #{tpu_custom_call.1} parent=1 // loop_header
      %s14 = sphi 0, %s18
      %p15 = scmp.ge.s32.totalorder %s14, 4
      %s24 = sphi 0, %s26
      %s27 = sphi 0, %s24
      %s28 = sphi 0, %s27
      %s44 = sphi 0, %s28
      %s48 = sphi 0, %s48
      %s50 = sphi 0, %s48
      %s51 = sphi 0, %s50
      %s65 = sphi 0, %s51
      %s69 = sphi 0, %s69
      %s71 = sphi 0, %s69
      %s72 = sphi 0, %s71
      %s86 = sphi 0, %s72
      %s90 = sphi 0, %s90
      %s92 = sphi 0, %s90
      %s93 = sphi 0, %s92
      %s107 = sphi 0, %s93
      %s111 = sphi 0, %s111
      %s113 = sphi 0, %s111
      %s114 = sphi 0, %s113
      %s128 = sphi 0, %s114
      %s134 = sphi 0, %s136
      %s137 = sphi 0, %s134
      %s138 = sphi 0, %s137
      %s154 = sphi 0, %s138
    $region4: #{tpu_custom_call.1} parent=1 // loop_header_branch
      %17 = sbr.rel (%p15) target = $region8
    $region5: #{tpu_custom_call.1} parent=1 // loop_body
      %s19 = ssub.s32 %s14, 1
      %s20 = ssub.s32 %s14, 2
      %s21 = sadd.s32 %s14, 1
      %s22 = ssub.s32 %s14, %s21
      %p23 = scmp.eq.s32.totalorder %s22, 0
      %s25 = sadd.s32 %s24, 1
      %s26 = scalar_select %p23, %s24, %s25
      %p29 = pneg %p23
      %p30 = scmp.eq.s32.totalorder %s14, 1
      %p31 = por %p29, %p30
      %p32 = scmp.ne.s32.totalorder %s24, %s27
      %p33 = scmp.eq.s32.totalorder %s14, 0
      %p34 = por %p32, %p33
      %p35 = scmp.ne.s32.totalorder %s24, %s27
      %p36 = scmp.eq.s32.totalorder %s19, 1
      %p37 = por %p35, %p36
      %p38 = scmp.ne.s32.totalorder %s27, %s28
      %p39 = scmp.eq.s32.totalorder %s19, 0
      %p40 = por %p38, %p39
      %p41 = scmp.ne.s32.totalorder %s27, %s28
      %p42 = scmp.eq.s32.totalorder %s20, 1
      %p43 = por %p41, %p42
      %p45 = scmp.ne.s32.totalorder %s28, %s44
      %p46 = scmp.eq.s32.totalorder %s20, 0
      %p47 = por %p45, %p46
      %s49 = sadd.s32 %s48, 1
      %p52 = scmp.eq.s32.totalorder %s14, 1
      %p53 = scmp.ne.s32.totalorder %s48, %s50
      %p54 = scmp.eq.s32.totalorder %s14, 0
      %p55 = por %p53, %p54
      %p56 = scmp.ne.s32.totalorder %s48, %s50
      %p57 = scmp.eq.s32.totalorder %s19, 1
      %p58 = por %p56, %p57
      %p59 = scmp.ne.s32.totalorder %s50, %s51
      %p60 = scmp.eq.s32.totalorder %s19, 0
      %p61 = por %p59, %p60
      %p62 = scmp.ne.s32.totalorder %s50, %s51
      %p63 = scmp.eq.s32.totalorder %s20, 1
      %p64 = por %p62, %p63
      %p66 = scmp.ne.s32.totalorder %s51, %s65
      %p67 = scmp.eq.s32.totalorder %s20, 0
      %p68 = por %p66, %p67
      %s70 = sadd.s32 %s69, 1
      %p73 = scmp.eq.s32.totalorder %s14, 1
      %p74 = scmp.ne.s32.totalorder %s69, %s71
      %p75 = scmp.eq.s32.totalorder %s14, 0
      %p76 = por %p74, %p75
      %p77 = scmp.ne.s32.totalorder %s69, %s71
      %p78 = scmp.eq.s32.totalorder %s19, 1
      %p79 = por %p77, %p78
      %p80 = scmp.ne.s32.totalorder %s71, %s72
      %p81 = scmp.eq.s32.totalorder %s19, 0
      %p82 = por %p80, %p81
      %p83 = scmp.ne.s32.totalorder %s71, %s72
      %p84 = scmp.eq.s32.totalorder %s20, 1
      %p85 = por %p83, %p84
      %p87 = scmp.ne.s32.totalorder %s72, %s86
      %p88 = scmp.eq.s32.totalorder %s20, 0
      %p89 = por %p87, %p88
      %s91 = sadd.s32 %s90, 1
      %p94 = scmp.eq.s32.totalorder %s14, 1
      %p95 = scmp.ne.s32.totalorder %s90, %s92
      %p96 = scmp.eq.s32.totalorder %s14, 0
      %p97 = por %p95, %p96
      %p98 = scmp.ne.s32.totalorder %s90, %s92
      %p99 = scmp.eq.s32.totalorder %s19, 1
      %p100 = por %p98, %p99
      %p101 = scmp.ne.s32.totalorder %s92, %s93
      %p102 = scmp.eq.s32.totalorder %s19, 0
      %p103 = por %p101, %p102
      %p104 = scmp.ne.s32.totalorder %s92, %s93
      %p105 = scmp.eq.s32.totalorder %s20, 1
      %p106 = por %p104, %p105
      %p108 = scmp.ne.s32.totalorder %s93, %s107
      %p109 = scmp.eq.s32.totalorder %s20, 0
      %p110 = por %p108, %p109
      %s112 = sadd.s32 %s111, 1
      %p115 = scmp.eq.s32.totalorder %s14, 1
      %p116 = scmp.ne.s32.totalorder %s111, %s113
      %p117 = scmp.eq.s32.totalorder %s14, 0
      %p118 = por %p116, %p117
      %p119 = scmp.ne.s32.totalorder %s111, %s113
      %p120 = scmp.eq.s32.totalorder %s19, 1
      %p121 = por %p119, %p120
      %p122 = scmp.ne.s32.totalorder %s113, %s114
      %p123 = scmp.eq.s32.totalorder %s19, 0
      %p124 = por %p122, %p123
      %p125 = scmp.ne.s32.totalorder %s113, %s114
      %p126 = scmp.eq.s32.totalorder %s20, 1
      %p127 = por %p125, %p126
      %p129 = scmp.ne.s32.totalorder %s114, %s128
      %p130 = scmp.eq.s32.totalorder %s20, 0
      %p131 = por %p129, %p130
      %s132 = ssub.s32 %s14, %s21
      %p133 = scmp.eq.s32.totalorder %s132, 0
      %s135 = sadd.s32 %s134, 1
      %s136 = scalar_select %p133, %s134, %s135
      %p139 = pneg %p133
      %p140 = scmp.eq.s32.totalorder %s14, 1
      %p141 = por %p139, %p140
      %p142 = scmp.ne.s32.totalorder %s134, %s137
      %p143 = scmp.eq.s32.totalorder %s14, 0
      %p144 = por %p142, %p143
      %p145 = scmp.ne.s32.totalorder %s134, %s137
      %p146 = scmp.eq.s32.totalorder %s19, 1
      %p147 = por %p145, %p146
      %p148 = scmp.ne.s32.totalorder %s137, %s138
      %p149 = scmp.eq.s32.totalorder %s19, 0
      %p150 = por %p148, %p149
      %p151 = scmp.ne.s32.totalorder %s137, %s138
      %p152 = scmp.eq.s32.totalorder %s20, 1
      %p153 = por %p151, %p152
      %p155 = scmp.ne.s32.totalorder %s138, %s154
      %p156 = scmp.eq.s32.totalorder %s20, 0
      %p157 = por %p155, %p156
      %p158 = scmp.le.s32.totalorder 1, %s14
      %p159 = scmp.lt.s32.totalorder %s14, 3
      %p160 = pnand %p158, %p159
      %p161 = pneg %p160
      // Predicated region
      $region9: #{tpu_custom_call.1} parent=5 // pred_check
        _
      $region10: #{tpu_custom_call.1} parent=5 // pred_check_branch
        %163 = sbr.rel (%p160) target = $region12
      $region11: #{tpu_custom_call.1} parent=5 // pred_region
        %s164 = ssub.s32 %s14, 1
        // Predicated region
        $region13: #{tpu_custom_call.1} parent=11 // pred_check
          %p165 = pneg %p61
        $region14: #{tpu_custom_call.1} parent=11 // pred_check_branch
          %167 = sbr.rel (%p165) target = $region16
        $region15: #{tpu_custom_call.1} parent=11 // pred_region
          _
        $region16: #{tpu_custom_call.1} parent=11 // pred_fallthru
          _
        // Predicated region
        $region17: #{tpu_custom_call.1} parent=11 // pred_check
          %p168 = pneg %p82
        $region18: #{tpu_custom_call.1} parent=11 // pred_check_branch
          %170 = sbr.rel (%p168) target = $region20
        $region19: #{tpu_custom_call.1} parent=11 // pred_region
          _
        $region20: #{tpu_custom_call.1} parent=11 // pred_fallthru
          _
        // Predicated region
        $region21: #{tpu_custom_call.1} parent=11 // pred_check
          %p171 = pneg %p103
        $region22: #{tpu_custom_call.1} parent=11 // pred_check_branch
          %173 = sbr.rel (%p171) target = $region24
        $region23: #{tpu_custom_call.1} parent=11 // pred_region
          _
        $region24: #{tpu_custom_call.1} parent=11 // pred_fallthru
          _
        // Predicated region
        $region25: #{tpu_custom_call.1} parent=11 // pred_check
          %p174 = pneg %p124
        $region26: #{tpu_custom_call.1} parent=11 // pred_check_branch
          %176 = sbr.rel (%p174) target = $region28
        $region27: #{tpu_custom_call.1} parent=11 // pred_region
          _
        $region28: #{tpu_custom_call.1} parent=11 // pred_fallthru
          _
      $region12: #{tpu_custom_call.1} parent=5 // pred_fallthru
        _
      %p177 = scmp.lt.s32.totalorder %s14, 2
      // Predicated region
      $region29: #{tpu_custom_call.1} parent=5 // pred_check
        %p178 = pneg %p177
      $region30: #{tpu_custom_call.1} parent=5 // pred_check_branch
        %180 = sbr.rel (%p178) target = $region32
      $region31: #{tpu_custom_call.1} parent=5 // pred_region
        // Predicated region
        $region33: #{tpu_custom_call.1} parent=31 // pred_check
          %p181 = pneg %p34
        $region34: #{tpu_custom_call.1} parent=31 // pred_check_branch
          %183 = sbr.rel (%p181) target = $region36
        $region35: #{tpu_custom_call.1} parent=31 // pred_region
          %s184 = smul.u32 16, %s14
          %p185 = scmp.lt.s32.totalorder %s184, 31
          %s186 = scalar_select %p185, %s184, 31
          %s187 = smul.addr %s186, 4
          %s188 = scalar_lea.vmem %s0, %s187
          %s189 = smul.u32 16, %s14
        $region36: #{tpu_custom_call.1} parent=31 // pred_fallthru
          _
      $region32: #{tpu_custom_call.1} parent=5 // pred_fallthru
        _
      %p190 = scmp.le.s32.totalorder 1, %s14
      %p191 = scmp.lt.s32.totalorder %s14, 3
      %p192 = pnand %p190, %p191
      %p193 = pneg %p192
      // Predicated region
      $region37: #{tpu_custom_call.1} parent=5 // pred_check
        _
      $region38: #{tpu_custom_call.1} parent=5 // pred_check_branch
        %195 = sbr.rel (%p192) target = $region40
      $region39: #{tpu_custom_call.1} parent=5 // pred_region
        %s196 = ssub.s32 %s14, 1
        %s197 = smul.u32 16, %s19
        %p198 = scmp.lt.s32.totalorder %s197, 31
        %s199 = scalar_select %p198, %s197, 31
        %s200 = smul.addr %s199, 4
        %s201 = scalar_lea.vmem %s0, %s200
        %p202 = pneg %p40
        %p203 = pneg %p37
        %p204 = pneg %p61
        %p205 = pneg %p58
        %p206 = pneg %p82
        %p207 = pneg %p79
        %p208 = pneg %p103
        %p209 = pneg %p100
        %p210 = pneg %p124
        %p211 = pneg %p121
        %p212 = pneg %p150
        %p213 = pneg %p147
        %s214 = sand.u32 %s137, 1
        %s215 = scalar_lea.sflag [#allocation3], %s214
        %s216 = sand.u32 %s137, 1
        %s217 = smul.addr %s216, 16
        %s218 = scalar_lea.vmem [#allocation2], %s217
        %s219 = smul.u32 16, %s19
        %p220 = scmp.lt.s32.totalorder %s219, 31
        %s221 = scalar_select %p220, %s219, 31
        %s222 = smul.addr %s221, 4
        %s223 = scalar_lea.vmem %s0, %s222
        %s224 = smul.u32 16, %s19
        %s225 = smul.u32 2, %s19
        %v227 = vld [vmem:[%s223] sm:$0xf]
        %v228 = vld [vmem:[%s223 + $0x4] sm:$0xf]
        %v229 = vld [vmem:[%s223 + $0x8] sm:$0xf]
        %v230 = vld [vmem:[%s223 + $0xc] sm:$0xf]
        %v231 = vld [vmem:[%s223 + $0x10] sm:$0xf]
        %v232 = vld [vmem:[%s223 + $0x14] sm:$0xf]
        %v233 = vld [vmem:[%s223 + $0x18] sm:$0xf]
        %v234 = vld [vmem:[%s223 + $0x1c] sm:$0xf]
        %v235 = vld [vmem:[%s223 + $0x20] sm:$0xf]
        %v236 = vld [vmem:[%s223 + $0x24] sm:$0xf]
        %v237 = vld [vmem:[%s223 + $0x28] sm:$0xf]
        %v238 = vld [vmem:[%s223 + $0x2c] sm:$0xf]
        %v239 = vld [vmem:[%s223 + $0x30] sm:$0xf]
        %v240 = vld [vmem:[%s223 + $0x34] sm:$0xf]
        %v241 = vld [vmem:[%s223 + $0x38] sm:$0xf]
        %v242 = vld [vmem:[%s223 + $0x3c] sm:$0xf]
        %v243 = vld [vmem:[%s1] sm:$0xf]
        %v244 = vld [vmem:[%s2] sm:$0x1]
        %v246 = vlaneseq
        %v247 = vshrl.u32 %v246, 7
        %v248 = vsub.s32 0, %v247
        %v249 = vrot.slane %v244, %v248
        %v267 = vunpack.c.l.b16 %v227
        %v268 = vunpack.c.l.b16 %v228
        %v269 = vunpack.c.l.b16 %v229
        %v270 = vunpack.c.l.b16 %v230
        %v271 = vunpack.c.l.b16 %v231
        %v272 = vunpack.c.l.b16 %v232
        %v273 = vunpack.c.l.b16 %v233
        %v274 = vunpack.c.l.b16 %v234
        %v275 = vunpack.c.l.b16 %v235
        %v276 = vunpack.c.l.b16 %v236
        %v277 = vunpack.c.l.b16 %v237
        %v278 = vunpack.c.l.b16 %v238
        %v279 = vunpack.c.l.b16 %v239
        %v280 = vunpack.c.l.b16 %v240
        %v281 = vunpack.c.l.b16 %v241
        %v282 = vunpack.c.l.b16 %v242
        %v283 = vpack.c.b16 %v268, %v267
        %v284 = vpack.c.b16 %v270, %v269
        %v285 = vpack.c.b16 %v272, %v271
        %v286 = vpack.c.b16 %v274, %v273
        %v287 = vpack.c.b16 %v276, %v275
        %v288 = vpack.c.b16 %v278, %v277
        %v289 = vpack.c.b16 %v280, %v279
        %v290 = vpack.c.b16 %v282, %v281
        %vm291 = vcmask 56320
        %v293 = vsel %vm291, %v283, 0
        %v296 = vsel %vm291, %v284, 0
        %v299 = vsel %vm291, %v285, 0
        %v302 = vsel %vm291, %v286, 0
        %v305 = vsel %vm291, %v287, 0
        %v308 = vsel %vm291, %v288, 0
        %v311 = vsel %vm291, %v289, 0
        %v314 = vsel %vm291, %v290, 0
        %vm316 = vcmask 1042432
        %vm317 = vcmask 1043456
        %v318 = vsel %vm316, 4294967295, 65535
        %v319 = vsel %vm317, %v318, 0
        %v321 = vand.u32 %v243, %v319
        %323 = vmatprep.subr.bf16.mxu0 0
        %324 = vmatpush1.bf16.msra.mxu0 0
        %325 = vmatprep.subr.bf16.mxu0 0
        %326 = vmatpush1.bf16.msra.mxu0 0
        %327 = vmatprep.subr.bf16.mxu0 0
        %328 = vmatpush1.bf16.msra.mxu0 0
        %329 = vmatprep.subr.bf16.mxu0 0
        %330 = vmatpush1.bf16.msra.mxu0 0
        %331 = vmatprep.subr.bf16.mxu0 0
        %332 = vmatpush1.bf16.msra.mxu0 0
        %333 = vmatprep.subr.bf16.mxu0 0
        %334 = vmatpush1.bf16.msra.mxu0 0
        %335 = vmatprep.subr.bf16.mxu0 0
        %336 = vmatpush1.bf16.msra.mxu0 0
        %337 = vmatprep.subr.bf16.mxu0 0
        %338 = vmatpush1.bf16.msra.mxu0 %v321
        %339 = vmatprep.subr.bf16.mxu0 0
        %340 = vmatpush2.bf16.msra.mxu0 0
        %341 = vmatprep.subr.bf16.mxu0 0
        %342 = vmatpush2.bf16.msra.mxu0 0
        %343 = vmatprep.subr.bf16.mxu0 0
        %344 = vmatpush2.bf16.msra.mxu0 0
        %345 = vmatprep.subr.bf16.mxu0 0
        %346 = vmatpush2.bf16.msra.mxu0 0
        %347 = vmatprep.subr.bf16.mxu0 0
        %348 = vmatpush2.bf16.msra.mxu0 0
        %349 = vmatprep.subr.bf16.mxu0 0
        %350 = vmatpush2.bf16.msra.mxu0 0
        %351 = vmatprep.subr.bf16.mxu0 0
        %352 = vmatpush2.bf16.msra.mxu0 0
        %353 = vmatprep.subr.bf16.mxu0 0
        %354 = vmatpush2.bf16.msra.mxu0 0
        %355 = vmatprep.mubr.bf16.mxu0 0
        %356 = vmatmul.mubr.bf16.gmra.mxu0 %v293
        %v357 = vpop.f32.mrf.mxu0
        %v358 = vadd.f32 %v249, %v357
        %v359 = vpop.f32.mrf.mxu0
        %v360 = vpop.f32.mrf.mxu0
        %v361 = vadd.f32 %v249, %v360
        %v362 = vpop.f32.mrf.mxu0
        %363 = vmatprep.mubr.bf16.mxu0 0
        %364 = vmatmul.mubr.bf16.gmra.mxu0 %v296
        %v365 = vpop.f32.mrf.mxu0
        %v366 = vadd.f32 %v249, %v365
        %v367 = vpop.f32.mrf.mxu0
        %v368 = vpop.f32.mrf.mxu0
        %v369 = vadd.f32 %v249, %v368
        %v370 = vpop.f32.mrf.mxu0
        %371 = vmatprep.mubr.bf16.mxu0 0
        %372 = vmatmul.mubr.bf16.gmra.mxu0 %v299
        %v373 = vpop.f32.mrf.mxu0
        %v374 = vadd.f32 %v249, %v373
        %v375 = vpop.f32.mrf.mxu0
        %v376 = vpop.f32.mrf.mxu0
        %v377 = vadd.f32 %v249, %v376
        %v378 = vpop.f32.mrf.mxu0
        %379 = vmatprep.mubr.bf16.mxu0 0
        %380 = vmatmul.mubr.bf16.gmra.mxu0 %v302
        %v381 = vpop.f32.mrf.mxu0
        %v382 = vadd.f32 %v249, %v381
        %v383 = vpop.f32.mrf.mxu0
        %v384 = vpop.f32.mrf.mxu0
        %v385 = vadd.f32 %v249, %v384
        %v386 = vpop.f32.mrf.mxu0
        %387 = vmatprep.mubr.bf16.mxu0 0
        %388 = vmatmul.mubr.bf16.gmra.mxu0 %v305
        %v389 = vpop.f32.mrf.mxu0
        %v390 = vadd.f32 %v249, %v389
        %v391 = vpop.f32.mrf.mxu0
        %v392 = vpop.f32.mrf.mxu0
        %v393 = vadd.f32 %v249, %v392
        %v394 = vpop.f32.mrf.mxu0
        %395 = vmatprep.mubr.bf16.mxu0 0
        %396 = vmatmul.mubr.bf16.gmra.mxu0 %v308
        %v397 = vpop.f32.mrf.mxu0
        %v398 = vadd.f32 %v249, %v397
        %v399 = vpop.f32.mrf.mxu0
        %v400 = vpop.f32.mrf.mxu0
        %v401 = vadd.f32 %v249, %v400
        %v402 = vpop.f32.mrf.mxu0
        %403 = vmatprep.mubr.bf16.mxu0 0
        %404 = vmatmul.mubr.bf16.gmra.mxu0 %v311
        %v405 = vpop.f32.mrf.mxu0
        %v406 = vadd.f32 %v249, %v405
        %v407 = vpop.f32.mrf.mxu0
        %v408 = vpop.f32.mrf.mxu0
        %v409 = vadd.f32 %v249, %v408
        %v410 = vpop.f32.mrf.mxu0
        %411 = vmatprep.mubr.bf16.mxu0 0
        %412 = vmatmul.mubr.bf16.gmra.mxu0 %v314
        %v413 = vpop.f32.mrf.mxu0
        %v414 = vadd.f32 %v249, %v413
        %v415 = vpop.f32.mrf.mxu0
        %v416 = vpop.f32.mrf.mxu0
        %v417 = vadd.f32 %v249, %v416
        %v418 = vpop.f32.mrf.mxu0
        %419 = vdwg.mxu0
        %v420 = vmax.f32 %v358, 0.0
        %v421 = vmax.f32 %v361, 0.0
        %v422 = vmax.f32 %v366, 0.0
        %v423 = vmax.f32 %v369, 0.0
        %v424 = vmax.f32 %v374, 0.0
        %v425 = vmax.f32 %v377, 0.0
        %v426 = vmax.f32 %v382, 0.0
        %v427 = vmax.f32 %v385, 0.0
        %v428 = vmax.f32 %v390, 0.0
        %v429 = vmax.f32 %v393, 0.0
        %v430 = vmax.f32 %v398, 0.0
        %v431 = vmax.f32 %v401, 0.0
        %v432 = vmax.f32 %v406, 0.0
        %v433 = vmax.f32 %v409, 0.0
        %v434 = vmax.f32 %v414, 0.0
        %v435 = vmax.f32 %v417, 0.0
        %v436 = vpack.c.bf16 %v421, %v420
        %v437 = vpack.c.bf16 %v423, %v422
        %v438 = vpack.c.bf16 %v425, %v424
        %v439 = vpack.c.bf16 %v427, %v426
        %v440 = vpack.c.bf16 %v429, %v428
        %v441 = vpack.c.bf16 %v431, %v430
        %v442 = vpack.c.bf16 %v433, %v432
        %v443 = vpack.c.bf16 %v435, %v434
        %v444 = vld [vmem:[%s3] sm:$0xf]
        %v445 = vld [vmem:[%s3 + $0x4] sm:$0xf]
        %v446 = vld [vmem:[%s4] sm:$0x1]
        %v448 = vlaneseq
        %v449 = vshrl.u32 %v448, 7
        %v450 = vsub.s32 0, %v449
        %v451 = vrot.slane %v446, %v450
        %v455 = vunpack.c.l.b16 %v444
        %v456 = vunpack.c.l.b16 %v445
        %v457 = vpack.c.b16 %v456, %v455
        %vm459 = vcmask 130048
        %v461 = vsel %vm459, %v436, 0
        %v464 = vsel %vm459, %v437, 0
        %v467 = vsel %vm459, %v438, 0
        %v470 = vsel %vm459, %v439, 0
        %v473 = vsel %vm459, %v440, 0
        %v476 = vsel %vm459, %v441, 0
        %v479 = vsel %vm459, %v442, 0
        %v482 = vsel %vm459, %v443, 0
        %484 = vmatprep.subr.bf16.mxu0 0
        %485 = vmatpush1.bf16.msra.mxu0 0
        %486 = vmatprep.subr.bf16.mxu0 0
        %487 = vmatpush1.bf16.msra.mxu0 0
        %488 = vmatprep.subr.bf16.mxu0 0
        %489 = vmatpush1.bf16.msra.mxu0 0
        %490 = vmatprep.subr.bf16.mxu0 0
        %491 = vmatpush1.bf16.msra.mxu0 0
        %492 = vmatprep.subr.bf16.mxu0 0
        %493 = vmatpush1.bf16.msra.mxu0 0
        %494 = vmatprep.subr.bf16.mxu0 0
        %495 = vmatpush1.bf16.msra.mxu0 0
        %496 = vmatprep.subr.bf16.mxu0 0
        %497 = vmatpush1.bf16.msra.mxu0 0
        %498 = vmatprep.subr.bf16.mxu0 0
        %499 = vmatpush1.bf16.msra.mxu0 %v457
        %500 = vmatprep.subr.bf16.mxu0 0
        %501 = vmatpush2.bf16.msra.mxu0 0
        %502 = vmatprep.subr.bf16.mxu0 0
        %503 = vmatpush2.bf16.msra.mxu0 0
        %504 = vmatprep.subr.bf16.mxu0 0
        %505 = vmatpush2.bf16.msra.mxu0 0
        %506 = vmatprep.subr.bf16.mxu0 0
        %507 = vmatpush2.bf16.msra.mxu0 0
        %508 = vmatprep.subr.bf16.mxu0 0
        %509 = vmatpush2.bf16.msra.mxu0 0
        %510 = vmatprep.subr.bf16.mxu0 0
        %511 = vmatpush2.bf16.msra.mxu0 0
        %512 = vmatprep.subr.bf16.mxu0 0
        %513 = vmatpush2.bf16.msra.mxu0 0
        %514 = vmatprep.subr.bf16.mxu0 0
        %515 = vmatpush2.bf16.msra.mxu0 0
        %516 = vmatprep.mubr.bf16.mxu0 0
        %517 = vmatmul.mubr.bf16.gmra.mxu0 %v461
        %v518 = vpop.f32.mrf.mxu0
        %v519 = vadd.f32 %v451, %v518
        %v520 = vpop.f32.mrf.mxu0
        %v521 = vpop.f32.mrf.mxu0
        %v522 = vadd.f32 %v451, %v521
        %v523 = vpop.f32.mrf.mxu0
        %524 = vmatprep.mubr.bf16.mxu0 0
        %525 = vmatmul.mubr.bf16.gmra.mxu0 %v464
        %v526 = vpop.f32.mrf.mxu0
        %v527 = vadd.f32 %v451, %v526
        %v528 = vpop.f32.mrf.mxu0
        %v529 = vpop.f32.mrf.mxu0
        %v530 = vadd.f32 %v451, %v529
        %v531 = vpop.f32.mrf.mxu0
        %532 = vmatprep.mubr.bf16.mxu0 0
        %533 = vmatmul.mubr.bf16.gmra.mxu0 %v467
        %v534 = vpop.f32.mrf.mxu0
        %v535 = vadd.f32 %v451, %v534
        %v536 = vpop.f32.mrf.mxu0
        %v537 = vpop.f32.mrf.mxu0
        %v538 = vadd.f32 %v451, %v537
        %v539 = vpop.f32.mrf.mxu0
        %540 = vmatprep.mubr.bf16.mxu0 0
        %541 = vmatmul.mubr.bf16.gmra.mxu0 %v470
        %v542 = vpop.f32.mrf.mxu0
        %v543 = vadd.f32 %v451, %v542
        %v544 = vpop.f32.mrf.mxu0
        %v545 = vpop.f32.mrf.mxu0
        %v546 = vadd.f32 %v451, %v545
        %v547 = vpop.f32.mrf.mxu0
        %548 = vmatprep.mubr.bf16.mxu0 0
        %549 = vmatmul.mubr.bf16.gmra.mxu0 %v473
        %v550 = vpop.f32.mrf.mxu0
        %v551 = vadd.f32 %v451, %v550
        %v552 = vpop.f32.mrf.mxu0
        %v553 = vpop.f32.mrf.mxu0
        %v554 = vadd.f32 %v451, %v553
        %v555 = vpop.f32.mrf.mxu0
        %556 = vmatprep.mubr.bf16.mxu0 0
        %557 = vmatmul.mubr.bf16.gmra.mxu0 %v476
        %v558 = vpop.f32.mrf.mxu0
        %v559 = vadd.f32 %v451, %v558
        %v560 = vpop.f32.mrf.mxu0
        %v561 = vpop.f32.mrf.mxu0
        %v562 = vadd.f32 %v451, %v561
        %v563 = vpop.f32.mrf.mxu0
        %564 = vmatprep.mubr.bf16.mxu0 0
        %565 = vmatmul.mubr.bf16.gmra.mxu0 %v479
        %v566 = vpop.f32.mrf.mxu0
        %v567 = vadd.f32 %v451, %v566
        %v568 = vpop.f32.mrf.mxu0
        %v569 = vpop.f32.mrf.mxu0
        %v570 = vadd.f32 %v451, %v569
        %v571 = vpop.f32.mrf.mxu0
        %572 = vmatprep.mubr.bf16.mxu0 0
        %573 = vmatmul.mubr.bf16.gmra.mxu0 %v482
        %v574 = vpop.f32.mrf.mxu0
        %v575 = vadd.f32 %v451, %v574
        %v576 = vpop.f32.mrf.mxu0
        %v577 = vpop.f32.mrf.mxu0
        %v578 = vadd.f32 %v451, %v577
        %v579 = vpop.f32.mrf.mxu0
        %580 = vdwg.mxu0
        %v581 = vmax.f32 %v519, 0.0
        %v582 = vmax.f32 %v522, 0.0
        %v583 = vmax.f32 %v527, 0.0
        %v584 = vmax.f32 %v530, 0.0
        %v585 = vmax.f32 %v535, 0.0
        %v586 = vmax.f32 %v538, 0.0
        %v587 = vmax.f32 %v543, 0.0
        %v588 = vmax.f32 %v546, 0.0
        %v589 = vmax.f32 %v551, 0.0
        %v590 = vmax.f32 %v554, 0.0
        %v591 = vmax.f32 %v559, 0.0
        %v592 = vmax.f32 %v562, 0.0
        %v593 = vmax.f32 %v567, 0.0
        %v594 = vmax.f32 %v570, 0.0
        %v595 = vmax.f32 %v575, 0.0
        %v596 = vmax.f32 %v578, 0.0
        %v597 = vrot.slane %v581, 4
        %v598 = vmax.f32 %v581, %v597
        %v599 = vrot.slane %v598, 2
        %v600 = vmax.f32 %v598, %v599
        %v601 = vrot.slane %v600, 1
        %v602 = vmax.f32 %v600, %v601
        %v603 = vrot.slane %v582, 4
        %v604 = vmax.f32 %v582, %v603
        %v605 = vrot.slane %v604, 2
        %v606 = vmax.f32 %v604, %v605
        %v607 = vrot.slane %v606, 1
        %v608 = vmax.f32 %v606, %v607
        %v609 = vrot.slane %v583, 4
        %v610 = vmax.f32 %v583, %v609
        %v611 = vrot.slane %v610, 2
        %v612 = vmax.f32 %v610, %v611
        %v613 = vrot.slane %v612, 1
        %v614 = vmax.f32 %v612, %v613
        %v615 = vrot.slane %v584, 4
        %v616 = vmax.f32 %v584, %v615
        %v617 = vrot.slane %v616, 2
        %v618 = vmax.f32 %v616, %v617
        %v619 = vrot.slane %v618, 1
        %v620 = vmax.f32 %v618, %v619
        %v621 = vrot.slane %v585, 4
        %v622 = vmax.f32 %v585, %v621
        %v623 = vrot.slane %v622, 2
        %v624 = vmax.f32 %v622, %v623
        %v625 = vrot.slane %v624, 1
        %v626 = vmax.f32 %v624, %v625
        %v627 = vrot.slane %v586, 4
        %v628 = vmax.f32 %v586, %v627
        %v629 = vrot.slane %v628, 2
        %v630 = vmax.f32 %v628, %v629
        %v631 = vrot.slane %v630, 1
        %v632 = vmax.f32 %v630, %v631
        %v633 = vrot.slane %v587, 4
        %v634 = vmax.f32 %v587, %v633
        %v635 = vrot.slane %v634, 2
        %v636 = vmax.f32 %v634, %v635
        %v637 = vrot.slane %v636, 1
        %v638 = vmax.f32 %v636, %v637
        %v639 = vrot.slane %v588, 4
        %v640 = vmax.f32 %v588, %v639
        %v641 = vrot.slane %v640, 2
        %v642 = vmax.f32 %v640, %v641
        %v643 = vrot.slane %v642, 1
        %v644 = vmax.f32 %v642, %v643
        %v645 = vrot.slane %v589, 4
        %v646 = vmax.f32 %v589, %v645
        %v647 = vrot.slane %v646, 2
        %v648 = vmax.f32 %v646, %v647
        %v649 = vrot.slane %v648, 1
        %v650 = vmax.f32 %v648, %v649
        %v651 = vrot.slane %v590, 4
        %v652 = vmax.f32 %v590, %v651
        %v653 = vrot.slane %v652, 2
        %v654 = vmax.f32 %v652, %v653
        %v655 = vrot.slane %v654, 1
        %v656 = vmax.f32 %v654, %v655
        %v657 = vrot.slane %v591, 4
        %v658 = vmax.f32 %v591, %v657
        %v659 = vrot.slane %v658, 2
        %v660 = vmax.f32 %v658, %v659
        %v661 = vrot.slane %v660, 1
        %v662 = vmax.f32 %v660, %v661
        %v663 = vrot.slane %v592, 4
        %v664 = vmax.f32 %v592, %v663
        %v665 = vrot.slane %v664, 2
        %v666 = vmax.f32 %v664, %v665
        %v667 = vrot.slane %v666, 1
        %v668 = vmax.f32 %v666, %v667
        %v669 = vrot.slane %v593, 4
        %v670 = vmax.f32 %v593, %v669
        %v671 = vrot.slane %v670, 2
        %v672 = vmax.f32 %v670, %v671
        %v673 = vrot.slane %v672, 1
        %v674 = vmax.f32 %v672, %v673
        %v675 = vrot.slane %v594, 4
        %v676 = vmax.f32 %v594, %v675
        %v677 = vrot.slane %v676, 2
        %v678 = vmax.f32 %v676, %v677
        %v679 = vrot.slane %v678, 1
        %v680 = vmax.f32 %v678, %v679
        %v681 = vrot.slane %v595, 4
        %v682 = vmax.f32 %v595, %v681
        %v683 = vrot.slane %v682, 2
        %v684 = vmax.f32 %v682, %v683
        %v685 = vrot.slane %v684, 1
        %v686 = vmax.f32 %v684, %v685
        %v687 = vrot.slane %v596, 4
        %v688 = vmax.f32 %v596, %v687
        %v689 = vrot.slane %v688, 2
        %v690 = vmax.f32 %v688, %v689
        %v691 = vrot.slane %v690, 1
        %v692 = vmax.f32 %v690, %v691
        %vm709 = vcmask 1041409
        %v710 = vsel %vm709, %v608, %v602
        %vm711 = vcmask 1042434
        %v712 = vsel %vm711, %v614, %v710
        %vm713 = vcmask 1043459
        %v714 = vsel %vm713, %v620, %v712
        %vm715 = vcmask 1044484
        %v716 = vsel %vm715, %v626, %v714
        %vm717 = vcmask 1045509
        %v718 = vsel %vm717, %v632, %v716
        %vm719 = vcmask 1046534
        %v720 = vsel %vm719, %v638, %v718
        %vm721 = vcmask 1047559
        %v722 = vsel %vm721, %v644, %v720
        %v723 = vsel %vm709, %v656, %v650
        %v724 = vsel %vm711, %v662, %v723
        %v725 = vsel %vm713, %v668, %v724
        %v726 = vsel %vm715, %v674, %v725
        %v727 = vsel %vm717, %v680, %v726
        %v728 = vsel %vm719, %v686, %v727
        %v729 = vsel %vm721, %v692, %v728
        %732 = vst [vmem:[%s218] sm:$0xff] %v722
        %733 = vst [vmem:[%s218 + $0x8] sm:$0xff] %v729
        %s734 = sand.u32 %s137, 1
        %s735 = scalar_lea.sflag [#allocation3], %s734
        %s736 = sand.u32 %s137, 1
        %s737 = smul.addr %s736, 16
        %s738 = scalar_lea.vmem [#allocation2], %s737
        // Predicated region
        $region41: #{tpu_custom_call.1} parent=39 // pred_check
          %p739 = pneg %p147
        $region42: #{tpu_custom_call.1} parent=39 // pred_check_branch
          %741 = sbr.rel (%p739) target = $region44
        $region43: #{tpu_custom_call.1} parent=39 // pred_region
          %s742 = smul.u32 2, %s19
          %s744 = ssub.s32 256, 256
          %745 = vsyncadd %s735, %s744
          %s746 = smul.addr %s742, 128
          %s747 = scalar_lea.hbm %s5, %s746
          %s748 = sshll.u32 %s738, 4
          %s749 = int_to_ptr.vmem [resolvable:$true] %s748
          %754 = dma.vmem_to_hbm [thread:$0]  %s749, 256, %s747, %s735, 128, 128, 8
        $region44: #{tpu_custom_call.1} parent=39 // pred_fallthru
          _
      $region40: #{tpu_custom_call.1} parent=5 // pred_fallthru
        _
      %p755 = scmp.le.s32.totalorder 2, %s14
      // Predicated region
      $region45: #{tpu_custom_call.1} parent=5 // pred_check
        %p756 = pneg %p755
      $region46: #{tpu_custom_call.1} parent=5 // pred_check_branch
        %758 = sbr.rel (%p756) target = $region48
      $region47: #{tpu_custom_call.1} parent=5 // pred_region
        %s759 = ssub.s32 %s14, 2
        // Predicated region
        $region49: #{tpu_custom_call.1} parent=47 // pred_check
          %p760 = pneg %p153
        $region50: #{tpu_custom_call.1} parent=47 // pred_check_branch
          %762 = sbr.rel (%p760) target = $region52
        $region51: #{tpu_custom_call.1} parent=47 // pred_region
          %s763 = sand.u32 %s138, 1
          %s764 = scalar_lea.sflag [#allocation3], %s763
          %s765 = sand.u32 %s138, 1
          %s766 = smul.addr %s765, 16
          %s767 = scalar_lea.vmem [#allocation2], %s766
          %768 = dma.done %s764, 256
        $region52: #{tpu_custom_call.1} parent=47 // pred_fallthru
          _
      $region48: #{tpu_custom_call.1} parent=5 // pred_fallthru
        _
    $region6: #{tpu_custom_call.1} parent=1 // loop_footer
      %s18 = sadd.s32 1, %s14
    $region7: #{tpu_custom_call.1} parent=1 // loop_footer_branch
      %13 = sbr.rel target = $region3
    $region8: #{tpu_custom_call.1} parent=1 // loop_exit
      _
    %769 = vsyncpa [#allocation3], 1
    %s770 = scalar_lea.sflag [#allocation3], 1
    %771 = vsyncpa %s770, 1

</llo_original>
